<compile_context>
chip_gen: v6e
topology: v6e:2x2x1
jax: 0.10.0
libtpu: 0.0.40
codegen_flags: <defaults>
</compile_context>

<pallas_src>
from functools import partial

import jax
import jax.numpy as jnp
from jax.experimental import pallas as pl
from jax.experimental.pallas import tpu as pltpu


# ----------------------------------------------------------------------------- #
# Single-pass kernel: whole (Bt, C, HW) block per grid step.
# ----------------------------------------------------------------------------- #
def _qca_fused_kernel(x_ref, b1e_ref, w1x_ref, w2_ref, b2_ref, o_ref, *, inv_hw):
    bt = x_ref.shape[0]

    w1x = w1x_ref[...]            # (C_red, C)   f32
    w2v = w2_ref[...]             # (C,    C_red) f32
    b2v = b2_ref[...]             # (C,    1)    f32
    b1e = b1e_ref[0]              # (C_red, Bt)  f32 (bias + attribute term, per image)

    # AdaptiveAvgPool2d(1): lane reduction per (image, channel), accumulated in f32,
    # then images moved to the minor axis so the MLP runs once per block.
    pooled_t = jnp.sum(x_ref[...], axis=-1, dtype=jnp.float32).T * inv_hw   # (C, Bt)

    # Conv1x1 #1 on cat([pooled, attr]) == W1x @ pooled + (b1 + W1a @ attr)  -> ReLU
    z1 = jnp.maximum(
        jnp.dot(w1x, pooled_t, preferred_element_type=jnp.float32) + b1e, 0.0)  # (C_red, Bt)
    # Conv1x1 #2 + Sigmoid
    z2 = jnp.dot(w2v, z1, preferred_element_type=jnp.float32) + b2v             # (C, Bt)
    gates = jax.nn.sigmoid(z2).astype(o_ref.dtype)                              # (C, Bt)

    # Channel-attention modulation; gate column broadcasts across the lane (HW) axis.
    for i in range(bt):                                    # static unroll, Bt <= 8
        o_ref[i] = x_ref[i] * gates[:, i:i + 1]


# ----------------------------------------------------------------------------- #
# Two-phase kernels for large feature maps (HW tiled, 'arbitrary' accumulation).
# ----------------------------------------------------------------------------- #
def _qca_gate_kernel(x_ref, b1e_ref, w1x_ref, w2_ref, b2_ref, gate_ref, acc_ref, *, inv_hw):
    h = pl.program_id(1)

    @pl.when(h == 0)
    def _():
        acc_ref[...] = jnp.zeros_like(acc_ref)

    acc_ref[...] += jnp.sum(x_ref[0], axis=-1, keepdims=True, dtype=jnp.float32)  # (C, 1)

    @pl.when(h == pl.num_programs(1) - 1)
    def _():
        pooled = acc_ref[...] * inv_hw                                            # (C, 1)
        z1 = jnp.maximum(
            jnp.dot(w1x_ref[...], pooled, preferred_element_type=jnp.float32)
            + b1e_ref[0], 0.0)                                                    # (C_red, 1)
        z2 = jnp.dot(w2_ref[...], z1, preferred_element_type=jnp.float32) + b2_ref[...]
        gate_ref[0] = jax.nn.sigmoid(z2)                                          # (C, 1) f32


def _qca_apply_kernel(x_ref, gate_ref, o_ref):
    o_ref[0] = x_ref[0] * gate_ref[0].astype(o_ref.dtype)


# ----------------------------------------------------------------------------- #
# Wrapper
# ----------------------------------------------------------------------------- #
def qca_layer_max_concat(x_nchw, attributes, w1, b1, w2, b2, *, max_block_bytes=None):
    """QCALayer(style='max_concat') forward.

    x_nchw:     (B, C, H, W)
    attributes: (B, M, 1, 1)   (as in the PyTorch forward)
    w1: (C_red, C + M), b1: (C_red,), w2: (C, C_red), b2: (C,)  -- 1x1-conv params.
    max_block_bytes: optional override of the per-block VMEM budget (testing / tuning).
    """
    B, C, H, W = x_nchw.shape
    M = attributes.shape[1]
    HW = H * W
    C_red = w1.shape[0]
    itemsize = jnp.dtype(x_nchw.dtype).itemsize

    # ---- lane/sublane density: pad HW to a multiple of 128, C to a multiple of 8 ----
    HW_pad = ((HW + 127) // 128) * 128
    C_pad = ((C + 7) // 8) * 8

    # (B, C, H, W) -> (B, C, HW) is a contiguous reshape (no transpose, no HBM pass).
    x_bch = x_nchw.reshape(B, C, HW)
    if C_pad != C or HW_pad != HW:
        x_bch = jnp.pad(x_bch, ((0, 0), (0, C_pad - C), (0, HW_pad - HW)))

    # ---- fold the attribute term into the first-conv bias (tiny JAX op) ----
    attrs = attributes.reshape(B, M).astype(jnp.float32)                  # (B, M)
    w1x = w1[:, :C].astype(jnp.float32)                                   # (C_red, C)
    w1a = w1[:, C:].astype(jnp.float32)                                   # (C_red, M)
    b1_eff = b1.astype(jnp.float32)[None, :] + attrs @ w1a.T              # (B, C_red)

    w1x_p = jnp.pad(w1x, ((0, 0), (0, C_pad - C)))                        # (C_red, C_pad)
    w2_p = jnp.pad(w2.astype(jnp.float32), ((0, C_pad - C), (0, 0)))      # (C_pad, C_red)
    b2_col = jnp.pad(b2.astype(jnp.float32), (0, C_pad - C)).reshape(C_pad, 1)

    # ---- generation-aware VMEM budgeting ----
    try:
        vmem_cap = int(pltpu.get_tpu_info().vmem_capacity_bytes)
    except Exception:
        vmem_cap = 64 << 20          # conservative (v7x per-TC physical VMEM)
    weight_bytes = 4 * (w1x_p.size + w2_p.size + b2_col.size + b1_eff.size)
    usable = int(0.75 * vmem_cap) - 2 * weight_bytes
    # Sweet-spot block (2-4 MiB); 4x covers 2x-input + 2x-output buffering of the block.
    block_budget = min(4 << 20, max(usable // 4, 256 * 1024))
    if max_block_bytes is not None:
        block_budget = int(max_block_bytes)

    per_image = C_pad * HW_pad * itemsize
    inv_hw = float(1.0 / HW)         # padded lanes are zero -> sum unaffected

    if per_image <= block_budget:
        # ------------------------- single-pass path ------------------------- #
        # Pick Bt so the grid actually pipelines (>=2 steps, even preferred for
        # v7x dual-TC sharding), then the largest Bt within the VMEM block budget.
        bt_cap = max(1, min(B, 8, block_budget // per_image))
        divisors = [d for d in range(1, bt_cap + 1) if B % d == 0]

        def rank(d):
            n = B // d
            return (n >= 2, n >= 2 and n % 2 == 0, n >= 4, d)

        Bt = max(divisors, key=rank)
        nT = B // Bt

        block_bytes = Bt * per_image
        vmem_limit = int(min(vmem_cap,
                             max(4 * block_bytes + 2 * weight_bytes + (2 << 20), 16 << 20)))

        # (B, C_red) -> per-block (C_red, Bt) column slabs, so the kernel needs no transpose.
        b1e_blocks = b1_eff.reshape(nT, Bt, C_red).transpose(0, 2, 1)     # (nT, C_red, Bt)

        cost = pl.CostEstimate(
            flops=int(3 * B * C_pad * HW_pad + 4 * B * C_red * C_pad),
            transcendentals=int(B * C_pad),
            bytes_accessed=int(2 * B * C_pad * HW_pad * itemsize + weight_bytes),
        )

        out = pl.pallas_call(
            partial(_qca_fused_kernel, inv_hw=inv_hw),
            out_shape=jax.ShapeDtypeStruct((B, C_pad, HW_pad), x_nchw.dtype),
            grid_spec=pltpu.PrefetchScalarGridSpec(
                num_scalar_prefetch=0,
                grid=(nT,),
                in_specs=[
                    pl.BlockSpec((Bt, C_pad, HW_pad), lambda t: (t, 0, 0)),   # x block
                    pl.BlockSpec((1, C_red, Bt), lambda t: (t, 0, 0)),        # b1_eff columns
                    pl.BlockSpec((C_red, C_pad), lambda t: (0, 0)),           # W1 (x part)
                    pl.BlockSpec((C_pad, C_red), lambda t: (0, 0)),           # W2
                    pl.BlockSpec((C_pad, 1), lambda t: (0, 0)),               # b2 column
                ],
                out_specs=pl.BlockSpec((Bt, C_pad, HW_pad), lambda t: (t, 0, 0)),
            ),
            compiler_params=pltpu.CompilerParams(
                dimension_semantics=("parallel",),
                vmem_limit_bytes=vmem_limit,
            ),
            cost_estimate=cost,
        )(x_bch, b1e_blocks, w1x_p, w2_p, b2_col)
    else:
        # --------------------- two-phase path (huge H*W) --------------------- #
        # Phase 1: HW-tiled pooled-sum accumulation + MLP -> per-image gates.
        # Phase 2: lane-dense apply (x * gate). Costs 1.5x HBM traffic but keeps
        # blocks in the pipelined sweet spot instead of one giant block per image.
        Thw = max(128, (block_budget // (C_pad * itemsize)) // 128 * 128)
        Thw = min(HW_pad, Thw)
        while HW_pad % Thw != 0:
            Thw -= 128
        nHW = HW_pad // Thw

        block_bytes = C_pad * Thw * itemsize
        vmem_limit = int(min(vmem_cap,
                             max(4 * block_bytes + 2 * weight_bytes + (2 << 20), 16 << 20)))

        b1e_cols = b1_eff[:, :, None]                                     # (B, C_red, 1)

        gates = pl.pallas_call(
            partial(_qca_gate_kernel, inv_hw=inv_hw),
            out_shape=jax.ShapeDtypeStruct((B, C_pad, 1), jnp.float32),
            grid_spec=pltpu.PrefetchScalarGridSpec(
                num_scalar_prefetch=0,
                grid=(B, nHW),
                in_specs=[
                    pl.BlockSpec((1, C_pad, Thw), lambda b, h: (b, 0, h)),    # x tile
                    pl.BlockSpec((1, C_red, 1), lambda b, h: (b, 0, 0)),      # b1_eff column
                    pl.BlockSpec((C_red, C_pad), lambda b, h: (0, 0)),        # W1 (x part)
                    pl.BlockSpec((C_pad, C_red), lambda b, h: (0, 0)),        # W2
                    pl.BlockSpec((C_pad, 1), lambda b, h: (0, 0)),            # b2 column
                ],
                out_specs=pl.BlockSpec((1, C_pad, 1), lambda b, h: (b, 0, 0)),
                scratch_shapes=[pltpu.VMEM((C_pad, 1), jnp.float32)],
            ),
            compiler_params=pltpu.CompilerParams(
                dimension_semantics=("parallel", "arbitrary"),
                vmem_limit_bytes=vmem_limit,
            ),
            cost_estimate=pl.CostEstimate(
                flops=int(B * C_pad * HW_pad + 4 * B * C_red * C_pad),
                transcendentals=int(B * C_pad),
                bytes_accessed=int(B * C_pad * HW_pad * itemsize + weight_bytes),
            ),
        )(x_bch, b1e_cols, w1x_p, w2_p, b2_col)

        out = pl.pallas_call(
            _qca_apply_kernel,
            out_shape=jax.ShapeDtypeStruct((B, C_pad, HW_pad), x_nchw.dtype),
            grid_spec=pltpu.PrefetchScalarGridSpec(
                num_scalar_prefetch=0,
                grid=(B, nHW),
                in_specs=[
                    pl.BlockSpec((1, C_pad, Thw), lambda b, h: (b, 0, h)),    # x tile
                    pl.BlockSpec((1, C_pad, 1), lambda b, h: (b, 0, 0)),      # gate column
                ],
                out_specs=pl.BlockSpec((1, C_pad, Thw), lambda b, h: (b, 0, h)),
            ),
            compiler_params=pltpu.CompilerParams(
                dimension_semantics=("parallel", "parallel"),
                vmem_limit_bytes=vmem_limit,
            ),
            cost_estimate=pl.CostEstimate(
                flops=int(B * C_pad * HW_pad),
                transcendentals=0,
                bytes_accessed=int(2 * B * C_pad * HW_pad * itemsize),
            ),
        )(x_bch, gates)

    if C_pad != C or HW_pad != HW:
        out = out[:, :C, :HW]
    return out.reshape(B, C, H, W)


# ----------------------------------------------------------------------------- #
# Pure-JAX reference mirroring the PyTorch forward (style='max_concat').
# ----------------------------------------------------------------------------- #
def qca_ref(x, attributes, w1, b1, w2, b2):
    y = jnp.mean(x, axis=(2, 3), keepdims=True)                          # (B, C, 1, 1)
    y = jnp.concatenate([y, attributes.astype(x.dtype)], axis=1)         # (B, C+M, 1, 1)
    z1 = jnp.einsum('oc,bchw->bohw', w1, y) + b1[None, :, None, None]
    z1 = jnp.maximum(z1, 0.0)
    z2 = jnp.einsum('oc,bchw->bohw', w2, z1) + b2[None, :, None, None]
    gate = jax.nn.sigmoid(z2)
    return x * gate


if __name__ == "__main__":
    # Module config: channel=64, reduction=16 (>=16 required), num_metadata=1, style='max_concat'
    B, C, H, W = 2, 64, 16, 16
    M = 1
    C_red = C // 16  # = 4

    key = jax.random.PRNGKey(0)
    kx, ka, k1, k2, k3, k4 = jax.random.split(key, 6)

    x = jax.random.normal(kx, (B, C, H, W), dtype=jnp.float32)
    attributes = jax.random.uniform(ka, (B, M, 1, 1), dtype=jnp.float32)

    # Deterministic synthetic 1x1-conv parameters (nn.Conv2d(C+M, C_red) / (C_red, C) shapes).
    w1 = 0.1 * jax.random.normal(k1, (C_red, C + M), dtype=jnp.float32)
    b1 = 0.1 * jax.random.normal(k2, (C_red,), dtype=jnp.float32)
    w2 = 0.1 * jax.random.normal(k3, (C, C_red), dtype=jnp.float32)
    b2 = 0.1 * jax.random.normal(k4, (C,), dtype=jnp.float32)

    ref = qca_ref(x, attributes, w1, b1, w2, b2)

    # Single-pass (default) path.
    out = jax.block_until_ready(qca_layer_max_concat(x, attributes, w1, b1, w2, b2))
    assert out.shape == (B, C, H, W)
    assert jnp.allclose(out, ref, rtol=1e-4, atol=1e-5), "fused-path mismatch vs reference"

    # Two-phase (large feature-map) path, exercised by forcing a tiny block budget.
    out2 = jax.block_until_ready(
        qca_layer_max_concat(x, attributes, w1, b1, w2, b2, max_block_bytes=32 * 1024))
    assert jnp.allclose(out2, ref, rtol=1e-4, atol=1e-5), "two-phase mismatch vs reference"

    print("KERNEL_OK")
</pallas_src>

<mosaic_0001>
module attributes {stable_mosaic.version = 11 : i64} {
  func.func @_qca_fused_kernel(%arg0: i32, %arg1: memref<1x64x256xf32, #tpu.memory_space<vmem>>, %arg2: memref<1x4x1xf32, #tpu.memory_space<vmem>>, %arg3: memref<4x64xf32, #tpu.memory_space<vmem>>, %arg4: memref<64x4xf32, #tpu.memory_space<vmem>>, %arg5: memref<64x1xf32, #tpu.memory_space<vmem>>, %arg6: memref<1x64x256xf32, #tpu.memory_space<vmem>>) attributes {dimension_semantics = [#tpu.dimension_semantics<parallel>], iteration_bounds = array<i64: 2>, scalar_prefetch = 0 : i64, scratch_operands = 0 : i64, tpu.core_type = #tpu.core_type<tc>, window_params = [{transform_indices = @transform_0, window_bounds = array<i64: 1, 64, 256>}, {transform_indices = @transform_1, window_bounds = array<i64: 1, 4, 1>}, {pipeline_mode = #tpu.pipeline_mode<synchronous>, transform_indices = @transform_2, window_bounds = array<i64: 4, 64>}, {pipeline_mode = #tpu.pipeline_mode<synchronous>, transform_indices = @transform_3, window_bounds = array<i64: 64, 4>}, {pipeline_mode = #tpu.pipeline_mode<synchronous>, transform_indices = @transform_4, window_bounds = array<i64: 64, 1>}, {transform_indices = @transform_5, window_bounds = array<i64: 1, 64, 256>}]} {
    %c0 = arith.constant 0 : index
    %c0_0 = arith.constant 0 : index
    %0 = vector.load %arg3[%c0, %c0_0] : memref<4x64xf32, #tpu.memory_space<vmem>>, vector<4x64xf32>
    %c0_1 = arith.constant 0 : index
    %c0_2 = arith.constant 0 : index
    %1 = vector.load %arg4[%c0_1, %c0_2] : memref<64x4xf32, #tpu.memory_space<vmem>>, vector<64x4xf32>
    %c0_3 = arith.constant 0 : index
    %c0_4 = arith.constant 0 : index
    %2 = vector.load %arg5[%c0_3, %c0_4] : memref<64x1xf32, #tpu.memory_space<vmem>>, vector<64x1xf32>
    %c0_5 = arith.constant 0 : index
    %c0_6 = arith.constant 0 : index
    %c0_7 = arith.constant 0 : index
    %3 = vector.load %arg2[%c0_5, %c0_6, %c0_7] : memref<1x4x1xf32, #tpu.memory_space<vmem>>, vector<1x4x1xf32>
    %4 = vector.shape_cast %3 : vector<1x4x1xf32> to vector<4x1xf32>
    %c0_8 = arith.constant 0 : index
    %c0_9 = arith.constant 0 : index
    %c0_10 = arith.constant 0 : index
    %5 = vector.load %arg1[%c0_8, %c0_9, %c0_10] : memref<1x64x256xf32, #tpu.memory_space<vmem>>, vector<1x64x256xf32>
    %cst = arith.constant dense<0.000000e+00> : vector<1x64xf32>
    %6 = vector.multi_reduction <add>, %5, %cst [2] : vector<1x64x256xf32> to vector<1x64xf32>
    %7 = tpu.transpose %6, [1, 0] : vector<1x64xf32> -> vector<64x1xf32>
    %cst_11 = arith.constant 3.906250e-03 : f32
    %8 = vector.broadcast %cst_11 : f32 to vector<64x1xf32>
    %9 = arith.mulf %7, %8 : vector<64x1xf32>
    %cst_12 = arith.constant dense<0.000000e+00> : vector<4x1xf32>
    %10 = tpu.matmul %0, %9, %cst_12 {dimension_numbers = #tpu.dot_dimension_numbers<[1], [0], [0], [1], [0, 0, 1, 1], [], []>} : vector<4x64xf32>, vector<64x1xf32>, vector<4x1xf32> -> vector<4x1xf32>
    %11 = arith.addf %10, %4 : vector<4x1xf32>
    %cst_13 = arith.constant 0.000000e+00 : f32
    %12 = vector.broadcast %cst_13 : f32 to vector<4x1xf32>
    %13 = arith.maximumf %11, %12 : vector<4x1xf32>
    %cst_14 = arith.constant dense<0.000000e+00> : vector<64x1xf32>
    %14 = tpu.matmul %1, %13, %cst_14 {dimension_numbers = #tpu.dot_dimension_numbers<[1], [0], [0], [1], [0, 0, 1, 1], [], []>} : vector<64x4xf32>, vector<4x1xf32>, vector<64x1xf32> -> vector<64x1xf32>
    %15 = arith.addf %14, %2 : vector<64x1xf32>
    %16 = arith.negf %15 : vector<64x1xf32>
    %17 = math.exp %16 : vector<64x1xf32>
    %cst_15 = arith.constant 1.000000e+00 : f32
    %18 = vector.broadcast %cst_15 : f32 to vector<64x1xf32>
    %19 = arith.addf %18, %17 : vector<64x1xf32>
    %20 = arith.divf %18, %19 : vector<64x1xf32>
    %c0_16 = arith.constant 0 : index
    %c0_17 = arith.constant 0 : index
    %c0_18 = arith.constant 0 : index
    %21 = vector.load %arg1[%c0_16, %c0_17, %c0_18] : memref<1x64x256xf32, #tpu.memory_space<vmem>>, vector<1x64x256xf32>
    %22 = vector.shape_cast %21 : vector<1x64x256xf32> to vector<64x256xf32>
    %23 = vector.broadcast %20 : vector<64x1xf32> to vector<64x256xf32>
    %24 = arith.mulf %22, %23 : vector<64x256xf32>
    %c0_19 = arith.constant 0 : index
    %c0_20 = arith.constant 0 : index
    %c0_21 = arith.constant 0 : index
    %25 = vector.load %arg6[%c0_19, %c0_20, %c0_21] : memref<1x64x256xf32, #tpu.memory_space<vmem>>, vector<1x64x256xf32>
    %26 = vector.shape_cast %25 : vector<1x64x256xf32> to vector<64x256xf32>
    %27 = vector.shape_cast %24 : vector<64x256xf32> to vector<1x64x256xf32>
    tpu.vector_store %arg6[%c0_19, %c0_20, %c0_21], %27 {strides = array<i32>} : memref<1x64x256xf32, #tpu.memory_space<vmem>>, vector<1x64x256xf32>,
    return
  }
  func.func @transform_0(%arg0: i32) -> (i32, i32, i32) {
    %c0_i32 = arith.constant 0 : i32
    %c0_i32_0 = arith.constant 0 : i32
    %c0_i32_1 = arith.constant 0 : i32
    return %arg0, %c0_i32, %c0_i32_0 : i32, i32, i32
  }
  func.func @transform_1(%arg0: i32) -> (i32, i32, i32) {
    %c0_i32 = arith.constant 0 : i32
    %c0_i32_0 = arith.constant 0 : i32
    %c0_i32_1 = arith.constant 0 : i32
    return %arg0, %c0_i32, %c0_i32_0 : i32, i32, i32
  }
  func.func @transform_2(%arg0: i32) -> (i32, i32) {
    %c0_i32 = arith.constant 0 : i32
    %c0_i32_0 = arith.constant 0 : i32
    %c0_i32_1 = arith.constant 0 : i32
    return %c0_i32, %c0_i32_0 : i32, i32
  }
  func.func @transform_3(%arg0: i32) -> (i32, i32) {
    %c0_i32 = arith.constant 0 : i32
    %c0_i32_0 = arith.constant 0 : i32
    %c0_i32_1 = arith.constant 0 : i32
    return %c0_i32, %c0_i32_0 : i32, i32
  }
  func.func @transform_4(%arg0: i32) -> (i32, i32) {
    %c0_i32 = arith.constant 0 : i32
    %c0_i32_0 = arith.constant 0 : i32
    %c0_i32_1 = arith.constant 0 : i32
    return %c0_i32, %c0_i32_0 : i32, i32
  }
  func.func @transform_5(%arg0: i32) -> (i32, i32, i32) {
    %c0_i32 = arith.constant 0 : i32
    %c0_i32_0 = arith.constant 0 : i32
    %c0_i32_1 = arith.constant 0 : i32
    return %arg0, %c0_i32, %c0_i32_0 : i32, i32, i32
  }
}

</mosaic_0001>

<llo_original>
// kernel: tpu_custom_call.1
$region0: #{tpu_custom_call.1}
  #allocation0 [shape = 'u32[]', space=smem, size = 0x4, offset = 0x4, fixed_abs, tag = 'smem constant byte address 0x4 - core index']
  #allocation1 [shape = 'u32[144,128]{1,0:T(1,128)}', space=vmem, size = 0x12000, scoped, tag = 'internal scratch']
  %s0 = inlined_call_operand.hbm [shape: f32[2,64,256], index: 0, kind: input, shape index: {}]
  %s1 = inlined_call_operand.vmem [shape: f32[2,4,1], index: 1, kind: input, shape index: {}]
  %s2 = inlined_call_operand.vmem [shape: f32[4,64], index: 2, kind: input, shape index: {}]
  %s3 = inlined_call_operand.vmem [shape: f32[64,4], index: 3, kind: input, shape index: {}]
  %s4 = inlined_call_operand.vmem [shape: f32[64,1], index: 4, kind: input, shape index: {}]
  %s5 = inlined_call_operand.hbm [shape: f32[2,64,256], index: 5, kind: output, shape index: {}]
  %s6 = sld [smem:[#allocation0]]
  $region57: #{tpu_custom_call.1} parent=0
    _
  %s8 = ssub.s32 1, %s6
  %s9 = scalar_select 0, %s8, %s6
  $region1: #{tpu_custom_call.1} parent=0
    #allocation2 [shape = 'u8[131072]{0}', space=vmem, size = 0x20000, scoped, tag = 'input window, operand 0']
    #allocation3 [shape = 's32[2]{0}', space=sflag, size = 0x8, scoped, tag = 'scoped memory for tpu_custom_call.1']
    #allocation4 [shape = 's32[2]{0}', space=sflag, size = 0x8, scoped, tag = 'scoped memory for tpu_custom_call.1']
    #allocation5 [shape = 'u8[131072]{0}', space=vmem, size = 0x20000, scoped, tag = 'output window, operand 0']
    %10 = vsyncpa [#allocation3], 0
    %s11 = scalar_lea.sflag [#allocation3], 1
    %12 = vsyncpa %s11, 0
    %13 = vsyncpa [#allocation4], 0
    %s14 = scalar_lea.sflag [#allocation4], 1
    %15 = vsyncpa %s14, 0
    loop: start=0, step=1, limit=4
    $region2: #{tpu_custom_call.1} parent=1 // loop_pre_header
      _
    $region3: #{tpu_custom_call.1} parent=1 // loop_header
      %s17 = sphi 0, %s21
      %p18 = scmp.ge.s32.totalorder %s17, 4
      %s27 = sphi 0, %s29
      %s30 = sphi 0, %s27
      %s31 = sphi 0, %s30
      %s47 = sphi 0, %s31
      %s53 = sphi 0, %s55
      %s56 = sphi 0, %s53
      %s57 = sphi 0, %s56
      %s73 = sphi 0, %s57
      %s77 = sphi 0, %s77
      %s79 = sphi 0, %s77
      %s80 = sphi 0, %s79
      %s94 = sphi 0, %s80
      %s98 = sphi 0, %s98
      %s100 = sphi 0, %s98
      %s101 = sphi 0, %s100
      %s115 = sphi 0, %s101
      %s119 = sphi 0, %s119
      %s121 = sphi 0, %s119
      %s122 = sphi 0, %s121
      %s136 = sphi 0, %s122
      %s142 = sphi 0, %s144
      %s145 = sphi 0, %s142
      %s146 = sphi 0, %s145
      %s162 = sphi 0, %s146
    $region4: #{tpu_custom_call.1} parent=1 // loop_header_branch
      %20 = sbr.rel (%p18) target = $region8
    $region5: #{tpu_custom_call.1} parent=1 // loop_body
      %s22 = ssub.s32 %s17, 1
      %s23 = ssub.s32 %s17, 2
      %s24 = sadd.s32 %s17, 1
      %s25 = ssub.s32 %s17, %s24
      %p26 = scmp.eq.s32.totalorder %s25, 0
      %s28 = sadd.s32 %s27, 1
      %s29 = scalar_select %p26, %s27, %s28
      %p32 = pneg %p26
      %p33 = scmp.eq.s32.totalorder %s17, 1
      %p34 = por %p32, %p33
      %p35 = scmp.ne.s32.totalorder %s27, %s30
      %p36 = scmp.eq.s32.totalorder %s17, 0
      %p37 = por %p35, %p36
      %p38 = scmp.ne.s32.totalorder %s27, %s30
      %p39 = scmp.eq.s32.totalorder %s22, 1
      %p40 = por %p38, %p39
      %p41 = scmp.ne.s32.totalorder %s30, %s31
      %p42 = scmp.eq.s32.totalorder %s22, 0
      %p43 = por %p41, %p42
      %p44 = scmp.ne.s32.totalorder %s30, %s31
      %p45 = scmp.eq.s32.totalorder %s23, 1
      %p46 = por %p44, %p45
      %p48 = scmp.ne.s32.totalorder %s31, %s47
      %p49 = scmp.eq.s32.totalorder %s23, 0
      %p50 = por %p48, %p49
      %s51 = ssub.s32 %s17, %s24
      %p52 = scmp.eq.s32.totalorder %s51, 0
      %s54 = sadd.s32 %s53, 1
      %s55 = scalar_select %p52, %s53, %s54
      %p58 = pneg %p52
      %p59 = scmp.eq.s32.totalorder %s17, 1
      %p60 = por %p58, %p59
      %p61 = scmp.ne.s32.totalorder %s53, %s56
      %p62 = scmp.eq.s32.totalorder %s17, 0
      %p63 = por %p61, %p62
      %p64 = scmp.ne.s32.totalorder %s53, %s56
      %p65 = scmp.eq.s32.totalorder %s22, 1
      %p66 = por %p64, %p65
      %p67 = scmp.ne.s32.totalorder %s56, %s57
      %p68 = scmp.eq.s32.totalorder %s22, 0
      %p69 = por %p67, %p68
      %p70 = scmp.ne.s32.totalorder %s56, %s57
      %p71 = scmp.eq.s32.totalorder %s23, 1
      %p72 = por %p70, %p71
      %p74 = scmp.ne.s32.totalorder %s57, %s73
      %p75 = scmp.eq.s32.totalorder %s23, 0
      %p76 = por %p74, %p75
      %s78 = sadd.s32 %s77, 1
      %p81 = scmp.eq.s32.totalorder %s17, 1
      %p82 = scmp.ne.s32.totalorder %s77, %s79
      %p83 = scmp.eq.s32.totalorder %s17, 0
      %p84 = por %p82, %p83
      %p85 = scmp.ne.s32.totalorder %s77, %s79
      %p86 = scmp.eq.s32.totalorder %s22, 1
      %p87 = por %p85, %p86
      %p88 = scmp.ne.s32.totalorder %s79, %s80
      %p89 = scmp.eq.s32.totalorder %s22, 0
      %p90 = por %p88, %p89
      %p91 = scmp.ne.s32.totalorder %s79, %s80
      %p92 = scmp.eq.s32.totalorder %s23, 1
      %p93 = por %p91, %p92
      %p95 = scmp.ne.s32.totalorder %s80, %s94
      %p96 = scmp.eq.s32.totalorder %s23, 0
      %p97 = por %p95, %p96
      %s99 = sadd.s32 %s98, 1
      %p102 = scmp.eq.s32.totalorder %s17, 1
      %p103 = scmp.ne.s32.totalorder %s98, %s100
      %p104 = scmp.eq.s32.totalorder %s17, 0
      %p105 = por %p103, %p104
      %p106 = scmp.ne.s32.totalorder %s98, %s100
      %p107 = scmp.eq.s32.totalorder %s22, 1
      %p108 = por %p106, %p107
      %p109 = scmp.ne.s32.totalorder %s100, %s101
      %p110 = scmp.eq.s32.totalorder %s22, 0
      %p111 = por %p109, %p110
      %p112 = scmp.ne.s32.totalorder %s100, %s101
      %p113 = scmp.eq.s32.totalorder %s23, 1
      %p114 = por %p112, %p113
      %p116 = scmp.ne.s32.totalorder %s101, %s115
      %p117 = scmp.eq.s32.totalorder %s23, 0
      %p118 = por %p116, %p117
      %s120 = sadd.s32 %s119, 1
      %p123 = scmp.eq.s32.totalorder %s17, 1
      %p124 = scmp.ne.s32.totalorder %s119, %s121
      %p125 = scmp.eq.s32.totalorder %s17, 0
      %p126 = por %p124, %p125
      %p127 = scmp.ne.s32.totalorder %s119, %s121
      %p128 = scmp.eq.s32.totalorder %s22, 1
      %p129 = por %p127, %p128
      %p130 = scmp.ne.s32.totalorder %s121, %s122
      %p131 = scmp.eq.s32.totalorder %s22, 0
      %p132 = por %p130, %p131
      %p133 = scmp.ne.s32.totalorder %s121, %s122
      %p134 = scmp.eq.s32.totalorder %s23, 1
      %p135 = por %p133, %p134
      %p137 = scmp.ne.s32.totalorder %s122, %s136
      %p138 = scmp.eq.s32.totalorder %s23, 0
      %p139 = por %p137, %p138
      %s140 = ssub.s32 %s17, %s24
      %p141 = scmp.eq.s32.totalorder %s140, 0
      %s143 = sadd.s32 %s142, 1
      %s144 = scalar_select %p141, %s142, %s143
      %p147 = pneg %p141
      %p148 = scmp.eq.s32.totalorder %s17, 1
      %p149 = por %p147, %p148
      %p150 = scmp.ne.s32.totalorder %s142, %s145
      %p151 = scmp.eq.s32.totalorder %s17, 0
      %p152 = por %p150, %p151
      %p153 = scmp.ne.s32.totalorder %s142, %s145
      %p154 = scmp.eq.s32.totalorder %s22, 1
      %p155 = por %p153, %p154
      %p156 = scmp.ne.s32.totalorder %s145, %s146
      %p157 = scmp.eq.s32.totalorder %s22, 0
      %p158 = por %p156, %p157
      %p159 = scmp.ne.s32.totalorder %s145, %s146
      %p160 = scmp.eq.s32.totalorder %s23, 1
      %p161 = por %p159, %p160
      %p163 = scmp.ne.s32.totalorder %s146, %s162
      %p164 = scmp.eq.s32.totalorder %s23, 0
      %p165 = por %p163, %p164
      %p166 = scmp.le.s32.totalorder 1, %s17
      %p167 = scmp.lt.s32.totalorder %s17, 3
      %p168 = pnand %p166, %p167
      %p169 = pneg %p168
      // Predicated region
      $region9: #{tpu_custom_call.1} parent=5 // pred_check
        _
      $region10: #{tpu_custom_call.1} parent=5 // pred_check_branch
        %171 = sbr.rel (%p168) target = $region12
      $region11: #{tpu_custom_call.1} parent=5 // pred_region
        %s172 = ssub.s32 %s17, 1
        // Predicated region
        $region13: #{tpu_custom_call.1} parent=11 // pred_check
          %p173 = pneg %p90
        $region14: #{tpu_custom_call.1} parent=11 // pred_check_branch
          %175 = sbr.rel (%p173) target = $region16
        $region15: #{tpu_custom_call.1} parent=11 // pred_region
          _
        $region16: #{tpu_custom_call.1} parent=11 // pred_fallthru
          _
        // Predicated region
        $region17: #{tpu_custom_call.1} parent=11 // pred_check
          %p176 = pneg %p111
        $region18: #{tpu_custom_call.1} parent=11 // pred_check_branch
          %178 = sbr.rel (%p176) target = $region20
        $region19: #{tpu_custom_call.1} parent=11 // pred_region
          _
        $region20: #{tpu_custom_call.1} parent=11 // pred_fallthru
          _
        // Predicated region
        $region21: #{tpu_custom_call.1} parent=11 // pred_check
          %p179 = pneg %p132
        $region22: #{tpu_custom_call.1} parent=11 // pred_check_branch
          %181 = sbr.rel (%p179) target = $region24
        $region23: #{tpu_custom_call.1} parent=11 // pred_region
          _
        $region24: #{tpu_custom_call.1} parent=11 // pred_fallthru
          _
      $region12: #{tpu_custom_call.1} parent=5 // pred_fallthru
        _
      %p182 = scmp.lt.s32.totalorder %s17, 2
      // Predicated region
      $region25: #{tpu_custom_call.1} parent=5 // pred_check
        %p183 = pneg %p182
      $region26: #{tpu_custom_call.1} parent=5 // pred_check_branch
        %185 = sbr.rel (%p183) target = $region28
      $region27: #{tpu_custom_call.1} parent=5 // pred_region
        // Predicated region
        $region29: #{tpu_custom_call.1} parent=27 // pred_check
          %p186 = pneg %p37
        $region30: #{tpu_custom_call.1} parent=27 // pred_check_branch
          %188 = sbr.rel (%p186) target = $region32
        $region31: #{tpu_custom_call.1} parent=27 // pred_region
          %s189 = sand.u32 %s27, 1
          %s190 = scalar_lea.sflag [#allocation3], %s189
          %s191 = sand.u32 %s27, 1
          %s192 = smul.addr %s191, 128
          %s193 = scalar_lea.vmem [#allocation2], %s192
          %s195 = ssub.s32 2048, 2048
          %196 = vsyncadd %s190, %s195
          %s197 = smul.addr %s17, 16
          %s198 = smul.addr %s197, 128
          %s199 = scalar_lea.hbm %s0, %s198
          %s200 = sshll.u32 %s193, 4
          %s201 = int_to_ptr.vmem [resolvable:$true] %s200
          %206 = dma.hbm_to_vmem [thread:$0]  %s199, 2048, %s201, %s190, 256, 256, 16
        $region32: #{tpu_custom_call.1} parent=27 // pred_fallthru
          _
        // Predicated region
        $region33: #{tpu_custom_call.1} parent=27 // pred_check
          %p207 = pneg %p63
        $region34: #{tpu_custom_call.1} parent=27 // pred_check_branch
          %209 = sbr.rel (%p207) target = $region36
        $region35: #{tpu_custom_call.1} parent=27 // pred_region
          %p210 = scmp.lt.s32.totalorder %s17, 1
          %s211 = scalar_select %p210, %s17, 1
          %s212 = smul.addr %s211, 4
          %s213 = scalar_lea.vmem %s1, %s212
        $region36: #{tpu_custom_call.1} parent=27 // pred_fallthru
          _
      $region28: #{tpu_custom_call.1} parent=5 // pred_fallthru
        _
      %p214 = scmp.le.s32.totalorder 1, %s17
      %p215 = scmp.lt.s32.totalorder %s17, 3
      %p216 = pnand %p214, %p215
      %p217 = pneg %p216
      // Predicated region
      $region37: #{tpu_custom_call.1} parent=5 // pred_check
        _
      $region38: #{tpu_custom_call.1} parent=5 // pred_check_branch
        %219 = sbr.rel (%p216) target = $region40
      $region39: #{tpu_custom_call.1} parent=5 // pred_region
        %s220 = ssub.s32 %s17, 1
        %s221 = sand.u32 %s30, 1
        %s222 = scalar_lea.sflag [#allocation3], %s221
        %s223 = sand.u32 %s30, 1
        %s224 = smul.addr %s223, 128
        %s225 = scalar_lea.vmem [#allocation2], %s224
        // Predicated region
        $region41: #{tpu_custom_call.1} parent=39 // pred_check
          %p226 = pneg %p43
        $region42: #{tpu_custom_call.1} parent=39 // pred_check_branch
          %228 = sbr.rel (%p226) target = $region44
        $region43: #{tpu_custom_call.1} parent=39 // pred_region
          %229 = dma.done %s222, 2048
        $region44: #{tpu_custom_call.1} parent=39 // pred_fallthru
          _
        %s230 = sand.u32 %s30, 1
        %s231 = scalar_lea.sflag [#allocation3], %s230
        %s232 = sand.u32 %s30, 1
        %s233 = smul.addr %s232, 128
        %s234 = scalar_lea.vmem [#allocation2], %s233
        %p235 = pneg %p43
        %p236 = pneg %p40
        %p237 = scmp.lt.s32.totalorder %s22, 1
        %s238 = scalar_select %p237, %s22, 1
        %s239 = smul.addr %s238, 4
        %s240 = scalar_lea.vmem %s1, %s239
        %p241 = pneg %p69
        %p242 = pneg %p66
        %p243 = pneg %p90
        %p244 = pneg %p87
        %p245 = pneg %p111
        %p246 = pneg %p108
        %p247 = pneg %p132
        %p248 = pneg %p129
        %p249 = pneg %p158
        %p250 = pneg %p155
        %s251 = sand.u32 %s145, 1
        %s252 = scalar_lea.sflag [#allocation4], %s251
        %s253 = sand.u32 %s145, 1
        %s254 = smul.addr %s253, 128
        %s255 = scalar_lea.vmem [#allocation5], %s254
        %p256 = scmp.lt.s32.totalorder %s22, 1
        %s257 = scalar_select %p256, %s22, 1
        %s258 = smul.addr %s257, 4
        %s259 = scalar_lea.vmem %s1, %s258
        %v260 = vld [vmem:[%s2] sm:$0xf]
        %v261 = vld [vmem:[%s3] sm:$0xff]
        %v262 = vld [vmem:[%s3 + $0x8] sm:$0xff]
        %v263 = vld [vmem:[%s3 + $0x10] sm:$0xff]
        %v264 = vld [vmem:[%s3 + $0x18] sm:$0xff]
        %v265 = vld [vmem:[%s3 + $0x20] sm:$0xff]
        %v266 = vld [vmem:[%s3 + $0x28] sm:$0xff]
        %v267 = vld [vmem:[%s3 + $0x30] sm:$0xff]
        %v268 = vld [vmem:[%s3 + $0x38] sm:$0xff]
        %v269 = vld [vmem:[%s4] sm:$0xff]
        %v270 = vld [vmem:[%s4 + $0x8] sm:$0xff]
        %v271 = vld [vmem:[%s4 + $0x10] sm:$0xff]
        %v272 = vld [vmem:[%s4 + $0x18] sm:$0xff]
        %v273 = vld [vmem:[%s4 + $0x20] sm:$0xff]
        %v274 = vld [vmem:[%s4 + $0x28] sm:$0xff]
        %v275 = vld [vmem:[%s4 + $0x30] sm:$0xff]
        %v276 = vld [vmem:[%s4 + $0x38] sm:$0xff]
        %v277 = vld [vmem:[%s259] sm:$0xf]
        %v278 = vld [vmem:[%s225] sm:$0xff]
        %v279 = vld [vmem:[%s225 + $0x8] sm:$0xff]
        %v280 = vld [vmem:[%s225 + $0x10] sm:$0xff]
        %v281 = vld [vmem:[%s225 + $0x18] sm:$0xff]
        %v282 = vld [vmem:[%s225 + $0x20] sm:$0xff]
        %v283 = vld [vmem:[%s225 + $0x28] sm:$0xff]
        %v284 = vld [vmem:[%s225 + $0x30] sm:$0xff]
        %v285 = vld [vmem:[%s225 + $0x38] sm:$0xff]
        %v286 = vld [vmem:[%s225 + $0x40] sm:$0xff]
        %v287 = vld [vmem:[%s225 + $0x48] sm:$0xff]
        %v288 = vld [vmem:[%s225 + $0x50] sm:$0xff]
        %v289 = vld [vmem:[%s225 + $0x58] sm:$0xff]
        %v290 = vld [vmem:[%s225 + $0x60] sm:$0xff]
        %v291 = vld [vmem:[%s225 + $0x68] sm:$0xff]
        %v292 = vld [vmem:[%s225 + $0x70] sm:$0xff]
        %v293 = vld [vmem:[%s225 + $0x78] sm:$0xff]
        %v294 = vadd.f32 %v278, %v279
        %295 = vadd.xlane.f32.xlu0 %v294
        %v296 = vpop.xlane.xlu0 %295
        %v297 = vadd.f32 %v280, %v281
        %298 = vadd.xlane.f32.xlu0 %v297
        %v299 = vpop.xlane.xlu0 %298
        %v300 = vadd.f32 %v282, %v283
        %301 = vadd.xlane.f32.xlu0 %v300
        %v302 = vpop.xlane.xlu0 %301
        %v303 = vadd.f32 %v284, %v285
        %304 = vadd.xlane.f32.xlu0 %v303
        %v305 = vpop.xlane.xlu0 %304
        %v306 = vadd.f32 %v286, %v287
        %307 = vadd.xlane.f32.xlu0 %v306
        %v308 = vpop.xlane.xlu0 %307
        %v309 = vadd.f32 %v288, %v289
        %310 = vadd.xlane.f32.xlu0 %v309
        %v311 = vpop.xlane.xlu0 %310
        %v312 = vadd.f32 %v290, %v291
        %313 = vadd.xlane.f32.xlu0 %v312
        %v314 = vpop.xlane.xlu0 %313
        %v315 = vadd.f32 %v292, %v293
        %316 = vadd.xlane.f32.xlu0 %v315
        %v317 = vpop.xlane.xlu0 %316
        %v326 = vlaneseq
        %v327 = vand.u32 %v326, 127
        %v328 = vlaneseq
        %v329 = vshrl.u32 %v328, 7
        %v330 = vsub.s32 %v327, %v329
        %v331 = vrot.slane %v296, %v330
        %v332 = vadd.s32 %v327, 4294967288
        %v333 = vlaneseq
        %v334 = vshrl.u32 %v333, 7
        %v335 = vsub.s32 %v332, %v334
        %v336 = vrot.slane %v299, %v335
        %vm337 = vcmask 130112
        %v338 = vsel %vm337, %v336, %v331
        %v339 = vadd.s32 %v327, 4294967280
        %v340 = vlaneseq
        %v341 = vshrl.u32 %v340, 7
        %v342 = vsub.s32 %v339, %v341
        %v343 = vrot.slane %v302, %v342
        %vm344 = vcmask 195712
        %v345 = vsel %vm344, %v343, %v338
        %v346 = vadd.s32 %v327, 4294967272
        %v347 = vlaneseq
        %v348 = vshrl.u32 %v347, 7
        %v349 = vsub.s32 %v346, %v348
        %v350 = vrot.slane %v305, %v349
        %vm351 = vcmask 261312
        %v352 = vsel %vm351, %v350, %v345
        %v353 = vadd.s32 %v327, 4294967264
        %v354 = vlaneseq
        %v355 = vshrl.u32 %v354, 7
        %v356 = vsub.s32 %v353, %v355
        %v357 = vrot.slane %v308, %v356
        %vm358 = vcmask 326912
        %v359 = vsel %vm358, %v357, %v352
        %v360 = vadd.s32 %v327, 4294967256
        %v361 = vlaneseq
        %v362 = vshrl.u32 %v361, 7
        %v363 = vsub.s32 %v360, %v362
        %v364 = vrot.slane %v311, %v363
        %vm365 = vcmask 392512
        %v366 = vsel %vm365, %v364, %v359
        %v367 = vadd.s32 %v327, 4294967248
        %v368 = vlaneseq
        %v369 = vshrl.u32 %v368, 7
        %v370 = vsub.s32 %v367, %v369
        %v371 = vrot.slane %v314, %v370
        %vm372 = vcmask 458112
        %v373 = vsel %vm372, %v371, %v366
        %v374 = vadd.s32 %v327, 4294967240
        %v375 = vlaneseq
        %v376 = vshrl.u32 %v375, 7
        %v377 = vsub.s32 %v374, %v376
        %v378 = vrot.slane %v317, %v377
        %vm379 = vcmask 523712
        %v380 = vsel %vm379, %v378, %v373
        %382 = vxpose.xlu0.b32.start [1/16] %v380, 128
        %383 = vxpose.xlu0.b32.cont [2/16] 0.0, 128
        %384 = vxpose.xlu0.b32.cont [3/16] 0.0, 128
        %385 = vxpose.xlu0.b32.cont [4/16] 0.0, 128
        %386 = vxpose.xlu0.b32.cont [5/16] 0.0, 128
        %387 = vxpose.xlu0.b32.cont [6/16] 0.0, 128
        %388 = vxpose.xlu0.b32.cont [7/16] 0.0, 128
        %389 = vxpose.xlu0.b32.cont [8/16] 0.0, 128
        %390 = vxpose.xlu0.b32.cont [9/16] 0.0, 128
        %391 = vxpose.xlu0.b32.cont [10/16] 0.0, 128
        %392 = vxpose.xlu0.b32.cont [11/16] 0.0, 128
        %393 = vxpose.xlu0.b32.cont [12/16] 0.0, 128
        %394 = vxpose.xlu0.b32.cont [13/16] 0.0, 128
        %395 = vxpose.xlu0.b32.cont [14/16] 0.0, 128
        %396 = vxpose.xlu0.b32.cont [15/16] 0.0, 128
        %397 = vxpose.xlu0.b32.end [16/16] 0.0, 128
        %v398 = vpop.trf.xlu0
        %v399 = vpop.trf.xlu0
        %v400 = vpop.trf.xlu0
        %v401 = vpop.trf.xlu0
        %v402 = vpop.trf.xlu0
        %v403 = vpop.trf.xlu0
        %v404 = vpop.trf.xlu0
        %v405 = vpop.trf.xlu0
        %v406 = vpop.trf.xlu0
        %v407 = vpop.trf.xlu0
        %v408 = vpop.trf.xlu0
        %v409 = vpop.trf.xlu0
        %v410 = vpop.trf.xlu0
        %v411 = vpop.trf.xlu0
        %v412 = vpop.trf.xlu0
        %v413 = vpop.trf.xlu0
        %v414 = vmul.f32 %v398, 0.00390625
        %v415 = vmul.f32 %v399, 0.00390625
        %v416 = vmul.f32 %v400, 0.00390625
        %v417 = vmul.f32 %v401, 0.00390625
        %v418 = vmul.f32 %v402, 0.00390625
        %v419 = vmul.f32 %v403, 0.00390625
        %v420 = vmul.f32 %v404, 0.00390625
        %v421 = vmul.f32 %v405, 0.00390625
        %vm422 = vcmask 523264
        %v424 = vsel %vm422, %v260, 0
        %426 = vmatprep.subr.mxu0 0.0
        %427 = vmatpush1.msra.mxu0 0.0
        %428 = vmatprep.subr.mxu0 0.0
        %429 = vmatpush1.msra.mxu0 0.0
        %430 = vmatprep.subr.mxu0 0.0
        %431 = vmatpush1.msra.mxu0 0.0
        %432 = vmatprep.subr.mxu0 0.0
        %433 = vmatpush1.msra.mxu0 0.0
        %434 = vmatprep.subr.mxu0 0.0
        %435 = vmatpush1.msra.mxu0 0.0
        %436 = vmatprep.subr.mxu0 0.0
        %437 = vmatpush1.msra.mxu0 0.0
        %438 = vmatprep.subr.mxu0 0.0
        %439 = vmatpush1.msra.mxu0 0.0
        %440 = vmatprep.subr.mxu0 0.0
        %441 = vmatpush1.msra.mxu0 0.0
        %442 = vmatprep.subr.mxu0 0.0
        %443 = vmatpush1.msra.mxu0 %v421
        %444 = vmatprep.subr.mxu0 0.0
        %445 = vmatpush1.msra.mxu0 %v420
        %446 = vmatprep.subr.mxu0 0.0
        %447 = vmatpush1.msra.mxu0 %v419
        %448 = vmatprep.subr.mxu0 0.0
        %449 = vmatpush1.msra.mxu0 %v418
        %450 = vmatprep.subr.mxu0 0.0
        %451 = vmatpush1.msra.mxu0 %v417
        %452 = vmatprep.subr.mxu0 0.0
        %453 = vmatpush1.msra.mxu0 %v416
        %454 = vmatprep.subr.mxu0 0.0
        %455 = vmatpush1.msra.mxu0 %v415
        %456 = vmatprep.subr.mxu0 0.0
        %457 = vmatpush1.msra.mxu0 %v414
        %458 = vmatprep.subr.mxu0 0.0
        %459 = vmatpush2.msra.mxu0 0.0
        %460 = vmatprep.subr.mxu0 0.0
        %461 = vmatpush2.msra.mxu0 0.0
        %462 = vmatprep.subr.mxu0 0.0
        %463 = vmatpush2.msra.mxu0 0.0
        %464 = vmatprep.subr.mxu0 0.0
        %465 = vmatpush2.msra.mxu0 0.0
        %466 = vmatprep.subr.mxu0 0.0
        %467 = vmatpush2.msra.mxu0 0.0
        %468 = vmatprep.subr.mxu0 0.0
        %469 = vmatpush2.msra.mxu0 0.0
        %470 = vmatprep.subr.mxu0 0.0
        %471 = vmatpush2.msra.mxu0 0.0
        %472 = vmatprep.subr.mxu0 0.0
        %473 = vmatpush2.msra.mxu0 0.0
        %474 = vmatprep.subr.mxu0 0.0
        %475 = vmatpush2.msra.mxu0 0.0
        %476 = vmatprep.subr.mxu0 0.0
        %477 = vmatpush2.msra.mxu0 0.0
        %478 = vmatprep.subr.mxu0 0.0
        %479 = vmatpush2.msra.mxu0 0.0
        %480 = vmatprep.subr.mxu0 0.0
        %481 = vmatpush2.msra.mxu0 0.0
        %482 = vmatprep.subr.mxu0 0.0
        %483 = vmatpush2.msra.mxu0 0.0
        %484 = vmatprep.subr.mxu0 0.0
        %485 = vmatpush2.msra.mxu0 0.0
        %486 = vmatprep.subr.mxu0 0.0
        %487 = vmatpush2.msra.mxu0 0.0
        %488 = vmatprep.subr.mxu0 0.0
        %489 = vmatpush2.msra.mxu0 0.0
        %490 = vmatprep.mubr.f32.mxu0 0.0
        %491 = vmatmul.mubr.f32.gmra.mxu0 %v424
        %v492 = vpop.f32.mrf.mxu0
        %v493 = vadd.f32 %v277, %v492
        %v494 = vpop.f32.mrf.mxu0
        %495 = vdwg.mxu0
        %v496 = vmax.f32 %v493, 0.0
        %vm497 = vcmask 31744
        %v499 = vsel %vm497, %v261, 0
        %v502 = vsel %vm497, %v262, 0
        %v505 = vsel %vm497, %v263, 0
        %v508 = vsel %vm497, %v264, 0
        %v511 = vsel %vm497, %v265, 0
        %v514 = vsel %vm497, %v266, 0
        %v517 = vsel %vm497, %v267, 0
        %v520 = vsel %vm497, %v268, 0
        %vm522 = vcmask 1043456
        %v524 = vsel %vm522, %v496, 0
        %526 = vmatprep.subr.mxu0 0.0
        %527 = vmatpush1.msra.mxu0 0.0
        %528 = vmatprep.subr.mxu0 0.0
        %529 = vmatpush1.msra.mxu0 0.0
        %530 = vmatprep.subr.mxu0 0.0
        %531 = vmatpush1.msra.mxu0 0.0
        %532 = vmatprep.subr.mxu0 0.0
        %533 = vmatpush1.msra.mxu0 0.0
        %534 = vmatprep.subr.mxu0 0.0
        %535 = vmatpush1.msra.mxu0 0.0
        %536 = vmatprep.subr.mxu0 0.0
        %537 = vmatpush1.msra.mxu0 0.0
        %538 = vmatprep.subr.mxu0 0.0
        %539 = vmatpush1.msra.mxu0 0.0
        %540 = vmatprep.subr.mxu0 0.0
        %541 = vmatpush1.msra.mxu0 0.0
        %542 = vmatprep.subr.mxu0 0.0
        %543 = vmatpush1.msra.mxu0 0.0
        %544 = vmatprep.subr.mxu0 0.0
        %545 = vmatpush1.msra.mxu0 0.0
        %546 = vmatprep.subr.mxu0 0.0
        %547 = vmatpush1.msra.mxu0 0.0
        %548 = vmatprep.subr.mxu0 0.0
        %549 = vmatpush1.msra.mxu0 0.0
        %550 = vmatprep.subr.mxu0 0.0
        %551 = vmatpush1.msra.mxu0 0.0
        %552 = vmatprep.subr.mxu0 0.0
        %553 = vmatpush1.msra.mxu0 0.0
        %554 = vmatprep.subr.mxu0 0.0
        %555 = vmatpush1.msra.mxu0 0.0
        %556 = vmatprep.subr.mxu0 0.0
        %557 = vmatpush1.msra.mxu0 %v524
        %558 = vmatprep.subr.mxu0 0.0
        %559 = vmatpush2.msra.mxu0 0.0
        %560 = vmatprep.subr.mxu0 0.0
        %561 = vmatpush2.msra.mxu0 0.0
        %562 = vmatprep.subr.mxu0 0.0
        %563 = vmatpush2.msra.mxu0 0.0
        %564 = vmatprep.subr.mxu0 0.0
        %565 = vmatpush2.msra.mxu0 0.0
        %566 = vmatprep.subr.mxu0 0.0
        %567 = vmatpush2.msra.mxu0 0.0
        %568 = vmatprep.subr.mxu0 0.0
        %569 = vmatpush2.msra.mxu0 0.0
        %570 = vmatprep.subr.mxu0 0.0
        %571 = vmatpush2.msra.mxu0 0.0
        %572 = vmatprep.subr.mxu0 0.0
        %573 = vmatpush2.msra.mxu0 0.0
        %574 = vmatprep.subr.mxu0 0.0
        %575 = vmatpush2.msra.mxu0 0.0
        %576 = vmatprep.subr.mxu0 0.0
        %577 = vmatpush2.msra.mxu0 0.0
        %578 = vmatprep.subr.mxu0 0.0
        %579 = vmatpush2.msra.mxu0 0.0
        %580 = vmatprep.subr.mxu0 0.0
        %581 = vmatpush2.msra.mxu0 0.0
        %582 = vmatprep.subr.mxu0 0.0
        %583 = vmatpush2.msra.mxu0 0.0
        %584 = vmatprep.subr.mxu0 0.0
        %585 = vmatpush2.msra.mxu0 0.0
        %586 = vmatprep.subr.mxu0 0.0
        %587 = vmatpush2.msra.mxu0 0.0
        %588 = vmatprep.subr.mxu0 0.0
        %589 = vmatpush2.msra.mxu0 0.0
        %590 = vmatprep.mubr.f32.mxu0 0.0
        %591 = vmatmul.mubr.f32.gmra.mxu0 %v499
        %v592 = vpop.f32.mrf.mxu0
        %v593 = vadd.f32 %v269, %v592
        %v594 = vpop.f32.mrf.mxu0
        %595 = vmatprep.mubr.f32.mxu0 0.0
        %596 = vmatmul.mubr.f32.gmra.mxu0 %v502
        %v597 = vpop.f32.mrf.mxu0
        %v598 = vadd.f32 %v270, %v597
        %v599 = vpop.f32.mrf.mxu0
        %600 = vmatprep.mubr.f32.mxu0 0.0
        %601 = vmatmul.mubr.f32.gmra.mxu0 %v505
        %v602 = vpop.f32.mrf.mxu0
        %v603 = vadd.f32 %v271, %v602
        %v604 = vpop.f32.mrf.mxu0
        %605 = vmatprep.mubr.f32.mxu0 0.0
        %606 = vmatmul.mubr.f32.gmra.mxu0 %v508
        %v607 = vpop.f32.mrf.mxu0
        %v608 = vadd.f32 %v272, %v607
        %v609 = vpop.f32.mrf.mxu0
        %610 = vmatprep.mubr.f32.mxu0 0.0
        %611 = vmatmul.mubr.f32.gmra.mxu0 %v511
        %v612 = vpop.f32.mrf.mxu0
        %v613 = vadd.f32 %v273, %v612
        %v614 = vpop.f32.mrf.mxu0
        %615 = vmatprep.mubr.f32.mxu0 0.0
        %616 = vmatmul.mubr.f32.gmra.mxu0 %v514
        %v617 = vpop.f32.mrf.mxu0
        %v618 = vadd.f32 %v274, %v617
        %v619 = vpop.f32.mrf.mxu0
        %620 = vmatprep.mubr.f32.mxu0 0.0
        %621 = vmatmul.mubr.f32.gmra.mxu0 %v517
        %v622 = vpop.f32.mrf.mxu0
        %v623 = vadd.f32 %v275, %v622
        %v624 = vpop.f32.mrf.mxu0
        %625 = vmatprep.mubr.f32.mxu0 0.0
        %626 = vmatmul.mubr.f32.gmra.mxu0 %v520
        %v627 = vpop.f32.mrf.mxu0
        %v628 = vadd.f32 %v276, %v627
        %v629 = vpop.f32.mrf.mxu0
        %630 = vdwg.mxu0
        %v631 = vxor.u32 %v593, 2147483648
        %v632 = vxor.u32 %v598, 2147483648
        %v633 = vxor.u32 %v603, 2147483648
        %v634 = vxor.u32 %v608, 2147483648
        %v635 = vxor.u32 %v613, 2147483648
        %v636 = vxor.u32 %v618, 2147483648
        %v637 = vxor.u32 %v623, 2147483648
        %v638 = vxor.u32 %v628, 2147483648
        %v639 = vmul.f32 %v631, 1.442695
        %v640 = vpow.pop %v639
        %v641 = vmul.f32 %v632, 1.442695
        %v642 = vpow.pop %v641
        %v643 = vmul.f32 %v633, 1.442695
        %v644 = vpow.pop %v643
        %v645 = vmul.f32 %v634, 1.442695
        %v646 = vpow.pop %v645
        %v647 = vmul.f32 %v635, 1.442695
        %v648 = vpow.pop %v647
        %v649 = vmul.f32 %v636, 1.442695
        %v650 = vpow.pop %v649
        %v651 = vmul.f32 %v637, 1.442695
        %v652 = vpow.pop %v651
        %v653 = vmul.f32 %v638, 1.442695
        %v654 = vpow.pop %v653
        %v655 = vadd.f32 %v640, 1.0
        %v656 = vadd.f32 %v642, 1.0
        %v657 = vadd.f32 %v644, 1.0
        %v658 = vadd.f32 %v646, 1.0
        %v659 = vadd.f32 %v648, 1.0
        %v660 = vadd.f32 %v650, 1.0
        %v661 = vadd.f32 %v652, 1.0
        %v662 = vadd.f32 %v654, 1.0
        %v663 = vrcp.pop %v655
        %v664 = vmul.f32 1.0, %v663
        %v665 = vrcp.pop %v656
        %v666 = vmul.f32 1.0, %v665
        %v667 = vrcp.pop %v657
        %v668 = vmul.f32 1.0, %v667
        %v669 = vrcp.pop %v658
        %v670 = vmul.f32 1.0, %v669
        %v671 = vrcp.pop %v659
        %v672 = vmul.f32 1.0, %v671
        %v673 = vrcp.pop %v660
        %v674 = vmul.f32 1.0, %v673
        %v675 = vrcp.pop %v661
        %v676 = vmul.f32 1.0, %v675
        %v677 = vrcp.pop %v662
        %v678 = vmul.f32 1.0, %v677
        %680 = vset.pattern.permute.xlu0 0
        %681 = vperm.xlu0 %680, %v664
        %v682 = vpop.permute.xlu0 %681
        %685 = vset.pattern.permute.xlu0 0
        %686 = vperm.xlu0 %685, %v666
        %v687 = vpop.permute.xlu0 %686
        %690 = vset.pattern.permute.xlu0 0
        %691 = vperm.xlu0 %690, %v668
        %v692 = vpop.permute.xlu0 %691
        %695 = vset.pattern.permute.xlu0 0
        %696 = vperm.xlu0 %695, %v670
        %v697 = vpop.permute.xlu0 %696
        %700 = vset.pattern.permute.xlu0 0
        %701 = vperm.xlu0 %700, %v672
        %v702 = vpop.permute.xlu0 %701
        %705 = vset.pattern.permute.xlu0 0
        %706 = vperm.xlu0 %705, %v674
        %v707 = vpop.permute.xlu0 %706
        %710 = vset.pattern.permute.xlu0 0
        %711 = vperm.xlu0 %710, %v676
        %v712 = vpop.permute.xlu0 %711
        %715 = vset.pattern.permute.xlu0 0
        %716 = vperm.xlu0 %715, %v678
        %v717 = vpop.permute.xlu0 %716
        %v719 = vmul.f32 %v278, %v682
        %v720 = vmul.f32 %v279, %v682
        %v721 = vmul.f32 %v280, %v687
        %v722 = vmul.f32 %v281, %v687
        %v723 = vmul.f32 %v282, %v692
        %v724 = vmul.f32 %v283, %v692
        %v725 = vmul.f32 %v284, %v697
        %v726 = vmul.f32 %v285, %v697
        %v727 = vmul.f32 %v286, %v702
        %v728 = vmul.f32 %v287, %v702
        %v729 = vmul.f32 %v288, %v707
        %v730 = vmul.f32 %v289, %v707
        %v731 = vmul.f32 %v290, %v712
        %v732 = vmul.f32 %v291, %v712
        %v733 = vmul.f32 %v292, %v717
        %v734 = vmul.f32 %v293, %v717
        %735 = vst [vmem:[%s255] sm:$0xff] %v719
        %736 = vst [vmem:[%s255 + $0x8] sm:$0xff] %v720
        %737 = vst [vmem:[%s255 + $0x10] sm:$0xff] %v721
        %738 = vst [vmem:[%s255 + $0x18] sm:$0xff] %v722
        %739 = vst [vmem:[%s255 + $0x20] sm:$0xff] %v723
        %740 = vst [vmem:[%s255 + $0x28] sm:$0xff] %v724
        %741 = vst [vmem:[%s255 + $0x30] sm:$0xff] %v725
        %742 = vst [vmem:[%s255 + $0x38] sm:$0xff] %v726
        %743 = vst [vmem:[%s255 + $0x40] sm:$0xff] %v727
        %744 = vst [vmem:[%s255 + $0x48] sm:$0xff] %v728
        %745 = vst [vmem:[%s255 + $0x50] sm:$0xff] %v729
        %746 = vst [vmem:[%s255 + $0x58] sm:$0xff] %v730
        %747 = vst [vmem:[%s255 + $0x60] sm:$0xff] %v731
        %748 = vst [vmem:[%s255 + $0x68] sm:$0xff] %v732
        %749 = vst [vmem:[%s255 + $0x70] sm:$0xff] %v733
        %750 = vst [vmem:[%s255 + $0x78] sm:$0xff] %v734
        %s751 = sand.u32 %s145, 1
        %s752 = scalar_lea.sflag [#allocation4], %s751
        %s753 = sand.u32 %s145, 1
        %s754 = smul.addr %s753, 128
        %s755 = scalar_lea.vmem [#allocation5], %s754
        // Predicated region
        $region45: #{tpu_custom_call.1} parent=39 // pred_check
          %p756 = pneg %p155
        $region46: #{tpu_custom_call.1} parent=39 // pred_check_branch
          %758 = sbr.rel (%p756) target = $region48
        $region47: #{tpu_custom_call.1} parent=39 // pred_region
          %s760 = ssub.s32 2048, 2048
          %761 = vsyncadd %s752, %s760
          %s762 = smul.addr %s22, 16
          %s763 = smul.addr %s762, 128
          %s764 = scalar_lea.hbm %s5, %s763
          %s765 = sshll.u32 %s755, 4
          %s766 = int_to_ptr.vmem [resolvable:$true] %s765
          %771 = dma.vmem_to_hbm [thread:$0]  %s766, 2048, %s764, %s752, 256, 256, 16
        $region48: #{tpu_custom_call.1} parent=39 // pred_fallthru
          _
      $region40: #{tpu_custom_call.1} parent=5 // pred_fallthru
        _
      %p772 = scmp.le.s32.totalorder 2, %s17
      // Predicated region
      $region49: #{tpu_custom_call.1} parent=5 // pred_check
        %p773 = pneg %p772
      $region50: #{tpu_custom_call.1} parent=5 // pred_check_branch
        %775 = sbr.rel (%p773) target = $region52
      $region51: #{tpu_custom_call.1} parent=5 // pred_region
        %s776 = ssub.s32 %s17, 2
        // Predicated region
        $region53: #{tpu_custom_call.1} parent=51 // pred_check
          %p777 = pneg %p161
        $region54: #{tpu_custom_call.1} parent=51 // pred_check_branch
          %779 = sbr.rel (%p777) target = $region56
        $region55: #{tpu_custom_call.1} parent=51 // pred_region
          %s780 = sand.u32 %s146, 1
          %s781 = scalar_lea.sflag [#allocation4], %s780
          %s782 = sand.u32 %s146, 1
          %s783 = smul.addr %s782, 128
          %s784 = scalar_lea.vmem [#allocation5], %s783
          %785 = dma.done %s781, 2048
        $region56: #{tpu_custom_call.1} parent=51 // pred_fallthru
          _
      $region52: #{tpu_custom_call.1} parent=5 // pred_fallthru
        _
    $region6: #{tpu_custom_call.1} parent=1 // loop_footer
      %s21 = sadd.s32 1, %s17
    $region7: #{tpu_custom_call.1} parent=1 // loop_footer_branch
      %16 = sbr.rel target = $region3
    $region8: #{tpu_custom_call.1} parent=1 // loop_exit
      _
    %786 = vsyncpa [#allocation3], 1
    %s787 = scalar_lea.sflag [#allocation3], 1
    %788 = vsyncpa %s787, 1
    %789 = vsyncpa [#allocation4], 1
    %s790 = scalar_lea.sflag [#allocation4], 1
    %791 = vsyncpa %s790, 1

</llo_original>
